<compile_context>
chip_gen: v7x
topology: tpu7x:2x2x1
jax: 0.10.0
libtpu: 0.0.40
codegen_flags: <defaults>
</compile_context>

<pallas_src>
import functools

import jax
import jax.numpy as jnp
from jax.experimental import pallas as pl
from jax.experimental.pallas import tpu as pltpu


def _scalar_net_kernel(xT_ref, wT_ref, b_ref, a_ref, o_ref, *, tanh_dtype):
    # xT_ref: (dim, TB)   wT_ref: (width, dim)   b_ref / a_ref: (width, 1)
    # o_ref:  (1, TB)
    # Pre-activation on the MXU (K=dim is tiny but the MXU slot is free):
    h = jnp.dot(wT_ref[...], xT_ref[...], preferred_element_type=jnp.float32)
    h = h + b_ref[...]                                  # VPU broadcast add
    act = jnp.tanh(h.astype(tanh_dtype))                # EUP (bf16 on v6e/v7x)
    # Width contraction: VPU multiply + XLU sublane reduce, f32 accumulation,
    # lane-dense (1, TB) store.
    o_ref[...] = jnp.sum(act.astype(jnp.float32) * a_ref[...], axis=0,
                         keepdims=True)


def _default_tanh_dtype():
    """bf16 tanh roughly doubles EUP throughput on v6e/v7x; v5e has no bf16 EUP."""
    try:
        kind = jax.devices()[0].device_kind.lower()
    except Exception:
        return jnp.float32
    if "v6" in kind or "v7" in kind:
        return jnp.bfloat16
    return jnp.float32


def _tile_batch(B, block_b):
    # Round user-supplied block_b down to a multiple of 128 (lane density),
    # shrink to the (128-padded) batch if the batch is smaller.
    block_b = max(128, (int(block_b) // 128) * 128)
    TB = min(block_b, 128 * pl.cdiv(B, 128))
    B_pad = TB * pl.cdiv(B, TB)
    return TB, B_pad


def _scalar_net_pallas(xT, W, b, a, TB, tanh_dtype, vmem_limit_bytes):
    dim, B_pad = xT.shape
    width = W.shape[1]

    wT = W.astype(jnp.float32).T                       # (width, dim)
    b2d = b.astype(jnp.float32).reshape(width, 1)
    a2d = a.astype(jnp.float32).reshape(width, 1)

    grid = (B_pad // TB,)
    kernel = functools.partial(_scalar_net_kernel, tanh_dtype=tanh_dtype)

    out = pl.pallas_call(
        kernel,
        out_shape=jax.ShapeDtypeStruct((1, B_pad), jnp.float32),
        grid=grid,
        in_specs=[
            pl.BlockSpec((dim, TB), lambda i: (0, i)),      # streamed x tile
            pl.BlockSpec((width, dim), lambda i: (0, 0)),   # VMEM-resident weights
            pl.BlockSpec((width, 1), lambda i: (0, 0)),
            pl.BlockSpec((width, 1), lambda i: (0, 0)),
        ],
        out_specs=pl.BlockSpec((1, TB), lambda i: (0, i)),  # lane-dense output
        compiler_params=pltpu.CompilerParams(
            dimension_semantics=("parallel",),
            vmem_limit_bytes=vmem_limit_bytes,
        ),
    )(xT, wT, b2d, a2d)
    return out


def scalar_net_forward(x, W, b, a, *, block_b=16384, tanh_dtype=None,
                       vmem_limit_bytes=None):
    """Pallas forward: tanh(x @ W + b) @ a  -> shape (batch,), float32.

    x is (batch, dim). The only wrapper-side HBM materialization is a single
    fused cast+transpose+pad copy; use scalar_net_forward_xT to skip it when x
    is already in (dim, batch) layout.
    """
    B, dim = x.shape
    TB, B_pad = _tile_batch(B, block_b)
    if tanh_dtype is None:
        tanh_dtype = _default_tanh_dtype()
    # Single fused copy: cast + transpose + pad.
    xT = jnp.pad(x.astype(jnp.float32).T, ((0, 0), (0, B_pad - B)))
    out = _scalar_net_pallas(xT, W, b, a, TB, tanh_dtype, vmem_limit_bytes)
    return out[0, :B]


def scalar_net_forward_xT(xT, W, b, a, *, block_b=16384, tanh_dtype=None,
                          vmem_limit_bytes=None):
    """Same as scalar_net_forward but takes x already transposed: (dim, batch).

    Avoids the wrapper transpose copy entirely when batch is already a
    multiple of the batch tile (otherwise a pad copy remains).
    """
    dim, B = xT.shape
    TB, B_pad = _tile_batch(B, block_b)
    if tanh_dtype is None:
        tanh_dtype = _default_tanh_dtype()
    xT = xT.astype(jnp.float32)
    if B_pad != B:
        xT = jnp.pad(xT, ((0, 0), (0, B_pad - B)))
    out = _scalar_net_pallas(xT, W, b, a, TB, tanh_dtype, vmem_limit_bytes)
    return out[0, :B]


def init_params(key, dim, width):
    """Deterministic synthetic parameters matching ScalarNet.init_params shapes.
    W: (dim, width), a: (width,), b: (width,) with scale=0.0 -> zeros."""
    kW, ka = jax.random.split(key)
    W = jax.random.normal(kW, (dim, width), dtype=jnp.float32) / jnp.sqrt(dim)
    a = jax.random.normal(ka, (width,), dtype=jnp.float32) / jnp.sqrt(width)
    b = jnp.zeros((width,), dtype=jnp.float32)
    return W, a, b


if __name__ == "__main__":
    key = jax.random.PRNGKey(0)
    kx, kx2, kb, kp = jax.random.split(key, 4)

    dim, width = 4, 32
    W, a, b = init_params(kp, dim, width)

    # 1) Small batch (single lane-dense tile), forced f32 tanh -> tight check.
    x_small = jax.random.normal(kx, (8, dim), dtype=jnp.float32)
    y_small = scalar_net_forward(x_small, W, b, a, tanh_dtype=jnp.float32)
    jax.block_until_ready(y_small)
    ref_small = jnp.tanh(x_small @ W + b) @ a
    assert y_small.shape == (8,)
    assert jnp.allclose(y_small, ref_small, atol=1e-5, rtol=1e-5)

    # 2) Ragged batch spanning several grid steps (tiling + padding), nonzero
    #    bias to exercise the bias-add path, f32 tanh -> tight check.
    x_big = jax.random.normal(kx2, (300, dim), dtype=jnp.float32)
    b_nz = 0.1 * jax.random.normal(kb, (width,), dtype=jnp.float32)
    y_big = scalar_net_forward(x_big, W, b_nz, a, block_b=128,
                               tanh_dtype=jnp.float32)
    jax.block_until_ready(y_big)
    ref_big = jnp.tanh(x_big @ W + b_nz) @ a
    assert y_big.shape == (300,)
    assert jnp.allclose(y_big, ref_big, atol=1e-5, rtol=1e-5)

    # 3) Default (auto) tanh dtype: bf16 on v6e/v7x, f32 on v5e -> relaxed check.
    y_auto = scalar_net_forward(x_big, W, b_nz, a)
    jax.block_until_ready(y_auto)
    assert y_auto.shape == (300,)
    assert jnp.allclose(y_auto, ref_big, atol=5e-2, rtol=5e-2)

    # 4) Transpose-free entry point (x supplied in (dim, batch) layout).
    y_xT = scalar_net_forward_xT(x_big.T, W, b_nz, a, tanh_dtype=jnp.float32)
    jax.block_until_ready(y_xT)
    assert y_xT.shape == (300,)
    assert jnp.allclose(y_xT, ref_big, atol=1e-5, rtol=1e-5)

    print("KERNEL_OK")
</pallas_src>

<mosaic_0001>
module attributes {stable_mosaic.version = 11 : i64} {
  func.func @_scalar_net_kernel(%arg0: i32, %arg1: memref<4x128xf32, #tpu.memory_space<vmem>>, %arg2: memref<32x4xf32, #tpu.memory_space<vmem>>, %arg3: memref<32x1xf32, #tpu.memory_space<vmem>>, %arg4: memref<32x1xf32, #tpu.memory_space<vmem>>, %arg5: memref<1x128xf32, #tpu.memory_space<vmem>>) attributes {dimension_semantics = [#tpu.dimension_semantics<parallel>], iteration_bounds = array<i64: 1>, scalar_prefetch = 0 : i64, scratch_operands = 0 : i64, tpu.core_type = #tpu.core_type<tc>, window_params = [{transform_indices = @transform_0, window_bounds = array<i64: 4, 128>}, {pipeline_mode = #tpu.pipeline_mode<synchronous>, transform_indices = @transform_1, window_bounds = array<i64: 32, 4>}, {pipeline_mode = #tpu.pipeline_mode<synchronous>, transform_indices = @transform_2, window_bounds = array<i64: 32, 1>}, {pipeline_mode = #tpu.pipeline_mode<synchronous>, transform_indices = @transform_3, window_bounds = array<i64: 32, 1>}, {transform_indices = @transform_4, window_bounds = array<i64: 1, 128>}]} {
    %c0 = arith.constant 0 : index
    %c0_0 = arith.constant 0 : index
    %0 = vector.load %arg2[%c0, %c0_0] : memref<32x4xf32, #tpu.memory_space<vmem>>, vector<32x4xf32>
    %c0_1 = arith.constant 0 : index
    %c0_2 = arith.constant 0 : index
    %1 = vector.load %arg1[%c0_1, %c0_2] : memref<4x128xf32, #tpu.memory_space<vmem>>, vector<4x128xf32>
    %cst = arith.constant dense<0.000000e+00> : vector<32x128xf32>
    %2 = tpu.matmul %0, %1, %cst {dimension_numbers = #tpu.dot_dimension_numbers<[1], [0], [0], [1], [0, 0, 1, 1], [], []>} : vector<32x4xf32>, vector<4x128xf32>, vector<32x128xf32> -> vector<32x128xf32>
    %c0_3 = arith.constant 0 : index
    %c0_4 = arith.constant 0 : index
    %3 = vector.load %arg3[%c0_3, %c0_4] : memref<32x1xf32, #tpu.memory_space<vmem>>, vector<32x1xf32>
    %4 = vector.broadcast %3 : vector<32x1xf32> to vector<32x128xf32>
    %5 = arith.addf %2, %4 : vector<32x128xf32>
    %6 = math.tanh %5 : vector<32x128xf32>
    %c0_5 = arith.constant 0 : index
    %c0_6 = arith.constant 0 : index
    %7 = vector.load %arg4[%c0_5, %c0_6] : memref<32x1xf32, #tpu.memory_space<vmem>>, vector<32x1xf32>
    %8 = vector.broadcast %7 : vector<32x1xf32> to vector<32x128xf32>
    %9 = arith.mulf %6, %8 : vector<32x128xf32>
    %cst_7 = arith.constant dense<0.000000e+00> : vector<128xf32>
    %10 = vector.multi_reduction <add>, %9, %cst_7 [0] : vector<32x128xf32> to vector<128xf32>
    %11 = vector.shape_cast %10 : vector<128xf32> to vector<1x128xf32>
    %c0_8 = arith.constant 0 : index
    %c0_9 = arith.constant 0 : index
    %12 = vector.load %arg5[%c0_8, %c0_9] : memref<1x128xf32, #tpu.memory_space<vmem>>, vector<1x128xf32>
    tpu.vector_store %arg5[%c0_8, %c0_9], %11 {strides = array<i32>} : memref<1x128xf32, #tpu.memory_space<vmem>>, vector<1x128xf32>,
    return
  }
  func.func @transform_0(%arg0: i32) -> (i32, i32) {
    %c0_i32 = arith.constant 0 : i32
    %c0_i32_0 = arith.constant 0 : i32
    return %c0_i32, %arg0 : i32, i32
  }
  func.func @transform_1(%arg0: i32) -> (i32, i32) {
    %c0_i32 = arith.constant 0 : i32
    %c0_i32_0 = arith.constant 0 : i32
    %c0_i32_1 = arith.constant 0 : i32
    return %c0_i32, %c0_i32_0 : i32, i32
  }
  func.func @transform_2(%arg0: i32) -> (i32, i32) {
    %c0_i32 = arith.constant 0 : i32
    %c0_i32_0 = arith.constant 0 : i32
    %c0_i32_1 = arith.constant 0 : i32
    return %c0_i32, %c0_i32_0 : i32, i32
  }
  func.func @transform_3(%arg0: i32) -> (i32, i32) {
    %c0_i32 = arith.constant 0 : i32
    %c0_i32_0 = arith.constant 0 : i32
    %c0_i32_1 = arith.constant 0 : i32
    return %c0_i32, %c0_i32_0 : i32, i32
  }
  func.func @transform_4(%arg0: i32) -> (i32, i32) {
    %c0_i32 = arith.constant 0 : i32
    %c0_i32_0 = arith.constant 0 : i32
    return %c0_i32, %arg0 : i32, i32
  }
}

</mosaic_0001>

<llo_original>
// kernel: tpu_custom_call.1
$region0: #{tpu_custom_call.1}
  #allocation0 [shape = 'u32[]', space=smem, size = 0x4, offset = 0x4, fixed_abs, tag = 'smem constant byte address 0x4 - core index']
  #allocation1 [shape = 'u32[144,128]{1,0:T(1,128)}', space=vmem, size = 0x12000, scoped, tag = 'internal scratch']
  %s0 = inlined_call_operand.vmem [shape: f32[4,128], index: 0, kind: input, shape index: {}]
  %s1 = inlined_call_operand.vmem [shape: f32[32,4], index: 1, kind: input, shape index: {}]
  %s2 = inlined_call_operand.vmem [shape: f32[32,1], index: 2, kind: input, shape index: {}]
  %s3 = inlined_call_operand.vmem [shape: f32[32,1], index: 3, kind: input, shape index: {}]
  %s4 = inlined_call_operand.hbm [shape: f32[1,128], index: 4, kind: output, shape index: {}]
  %s5 = sld [smem:[#allocation0]]
  $region26: #{tpu_custom_call.1} parent=0
    _
  %s7 = ssub.s32 1, %s5
  %s8 = scalar_select 0, %s7, %s5
  $region1: #{tpu_custom_call.1} parent=0
    #allocation2 [shape = 'u8[512]{0}', space=vmem, size = 0x400, scoped, tag = 'output window, operand 0, single buffered']
    #allocation3 [shape = 's32[1]{0}', space=sflag, size = 0x4, scoped, tag = 'scoped memory for tpu_custom_call.1']
    %9 = vsyncpa [#allocation3], 0
    // Predicated region
    $region2: #{tpu_custom_call.1} parent=1 // pred_check
      _
    $region3: #{tpu_custom_call.1} parent=1 // pred_check_branch
      %11 = sbr.rel (0) target = $region5
    $region4: #{tpu_custom_call.1} parent=1 // pred_region
      _
    $region5: #{tpu_custom_call.1} parent=1 // pred_fallthru
      _
    // Predicated region
    $region6: #{tpu_custom_call.1} parent=1 // pred_check
      _
    $region7: #{tpu_custom_call.1} parent=1 // pred_check_branch
      %13 = sbr.rel (0) target = $region9
    $region8: #{tpu_custom_call.1} parent=1 // pred_region
      _
    $region9: #{tpu_custom_call.1} parent=1 // pred_fallthru
      _
    // Predicated region
    $region10: #{tpu_custom_call.1} parent=1 // pred_check
      _
    $region11: #{tpu_custom_call.1} parent=1 // pred_check_branch
      %15 = sbr.rel (0) target = $region13
    $region12: #{tpu_custom_call.1} parent=1 // pred_region
      _
    $region13: #{tpu_custom_call.1} parent=1 // pred_fallthru
      _
    // Predicated region
    $region14: #{tpu_custom_call.1} parent=1 // pred_check
      _
    $region15: #{tpu_custom_call.1} parent=1 // pred_check_branch
      %17 = sbr.rel (0) target = $region17
    $region16: #{tpu_custom_call.1} parent=1 // pred_region
      _
    $region17: #{tpu_custom_call.1} parent=1 // pred_fallthru
      _
    %v18 = vld [vmem:[%s1] sm:$0xff]
    %v19 = vld [vmem:[%s1 + $0x8] sm:$0xff]
    %v20 = vld [vmem:[%s1 + $0x10] sm:$0xff]
    %v21 = vld [vmem:[%s1 + $0x18] sm:$0xff]
    %v22 = vld [vmem:[%s0] sm:$0xf]
    %v23 = vld [vmem:[%s2] sm:$0xff]
    %v24 = vld [vmem:[%s2 + $0x8] sm:$0xff]
    %v25 = vld [vmem:[%s2 + $0x10] sm:$0xff]
    %v26 = vld [vmem:[%s2 + $0x18] sm:$0xff]
    %28 = vset.pattern.permute.xlu0 0
    %29 = vperm.xlu0 %28, %v23
    %v30 = vpop.permute.xlu0 %29
    %33 = vset.pattern.permute.xlu0 0
    %34 = vperm.xlu0 %33, %v24
    %v35 = vpop.permute.xlu0 %34
    %38 = vset.pattern.permute.xlu0 0
    %39 = vperm.xlu0 %38, %v25
    %v40 = vpop.permute.xlu0 %39
    %43 = vset.pattern.permute.xlu0 0
    %44 = vperm.xlu0 %43, %v26
    %v45 = vpop.permute.xlu0 %44
    %vm47 = vcmask 31744
    %v49 = vsel %vm47, %v18, 0
    %v52 = vsel %vm47, %v19, 0
    %v55 = vsel %vm47, %v20, 0
    %v58 = vsel %vm47, %v21, 0
    %vm60 = vcmask 1043456
    %v62 = vsel %vm60, %v22, 0
    %64 = vmatprep.subr.mxu0 0.0
    %65 = vmatpush1.msra.mxu0 %v62
    %66 = vmatprep.subr.mxu0 0.0
    %67 = vmatpush1.msra.mxu0 0.0
    %68 = vmatprep.subr.mxu0 0.0
    %69 = vmatpush1.msra.mxu0 0.0
    %70 = vmatprep.subr.mxu0 0.0
    %71 = vmatpush1.msra.mxu0 0.0
    %72 = vmatprep.subr.mxu0 0.0
    %73 = vmatpush1.msra.mxu0 0.0
    %74 = vmatprep.subr.mxu0 0.0
    %75 = vmatpush1.msra.mxu0 0.0
    %76 = vmatprep.subr.mxu0 0.0
    %77 = vmatpush1.msra.mxu0 0.0
    %78 = vmatprep.subr.mxu0 0.0
    %79 = vmatpush1.msra.mxu0 0.0
    %80 = vmatprep.subr.mxu0 0.0
    %81 = vmatpush1.msra.mxu0 0.0
    %82 = vmatprep.subr.mxu0 0.0
    %83 = vmatpush1.msra.mxu0 0.0
    %84 = vmatprep.subr.mxu0 0.0
    %85 = vmatpush1.msra.mxu0 0.0
    %86 = vmatprep.subr.mxu0 0.0
    %87 = vmatpush1.msra.mxu0 0.0
    %88 = vmatprep.subr.mxu0 0.0
    %89 = vmatpush1.msra.mxu0 0.0
    %90 = vmatprep.subr.mxu0 0.0
    %91 = vmatpush1.msra.mxu0 0.0
    %92 = vmatprep.subr.mxu0 0.0
    %93 = vmatpush1.msra.mxu0 0.0
    %94 = vmatprep.subr.mxu0 0.0
    %95 = vmatpush1.msra.mxu0 0.0
    %96 = vmatprep.subr.mxu0 0.0
    %97 = vmatpush1.msra.mxu0 0.0
    %98 = vmatprep.subr.mxu0 0.0
    %99 = vmatpush1.msra.mxu0 0.0
    %100 = vmatprep.subr.mxu0 0.0
    %101 = vmatpush1.msra.mxu0 0.0
    %102 = vmatprep.subr.mxu0 0.0
    %103 = vmatpush1.msra.mxu0 0.0
    %104 = vmatprep.subr.mxu0 0.0
    %105 = vmatpush1.msra.mxu0 0.0
    %106 = vmatprep.subr.mxu0 0.0
    %107 = vmatpush1.msra.mxu0 0.0
    %108 = vmatprep.subr.mxu0 0.0
    %109 = vmatpush1.msra.mxu0 0.0
    %110 = vmatprep.subr.mxu0 0.0
    %111 = vmatpush1.msra.mxu0 0.0
    %112 = vmatprep.subr.mxu0 0.0
    %113 = vmatpush1.msra.mxu0 0.0
    %114 = vmatprep.subr.mxu0 0.0
    %115 = vmatpush1.msra.mxu0 0.0
    %116 = vmatprep.subr.mxu0 0.0
    %117 = vmatpush1.msra.mxu0 0.0
    %118 = vmatprep.subr.mxu0 0.0
    %119 = vmatpush1.msra.mxu0 0.0
    %120 = vmatprep.subr.mxu0 0.0
    %121 = vmatpush1.msra.mxu0 0.0
    %122 = vmatprep.subr.mxu0 0.0
    %123 = vmatpush1.msra.mxu0 0.0
    %124 = vmatprep.subr.mxu0 0.0
    %125 = vmatpush1.msra.mxu0 0.0
    %126 = vmatprep.subr.mxu0 0.0
    %127 = vmatpush1.msra.mxu0 0.0
    %128 = vmatprep.mubr.f32.mxu0 0.0
    %129 = vmatmul.mubr.f32.gmra.mrb[0].mxu0 %v49
    %v130 = vpop.f32.mrb[0].mxu0
    %v131 = vadd.f32 %v30, %v130
    %v132 = vpop.f32.mrb[0].mxu0
    %133 = vmatprep.mubr.f32.mxu0 0.0
    %134 = vmatmul.mubr.f32.gmra.mrb[0].mxu0 %v52
    %v135 = vpop.f32.mrb[0].mxu0
    %v136 = vadd.f32 %v35, %v135
    %v137 = vpop.f32.mrb[0].mxu0
    %138 = vmatprep.mubr.f32.mxu0 0.0
    %139 = vmatmul.mubr.f32.gmra.mrb[0].mxu0 %v55
    %v140 = vpop.f32.mrb[0].mxu0
    %v141 = vadd.f32 %v40, %v140
    %v142 = vpop.f32.mrb[0].mxu0
    %143 = vmatprep.mubr.f32.mxu0 0.0
    %144 = vmatmul.mubr.f32.gmra.mrb[0].mxu0 %v58
    %v145 = vpop.f32.mrb[0].mxu0
    %v146 = vadd.f32 %v45, %v145
    %v147 = vpop.f32.mrb[0].mxu0
    %148 = vdwg.mxu0
    %v149 = vtanh.pop %v131
    %v150 = vtanh.pop %v136
    %v151 = vtanh.pop %v141
    %v152 = vtanh.pop %v146
    %v153 = vld [vmem:[%s3] sm:$0xff]
    %v154 = vld [vmem:[%s3 + $0x8] sm:$0xff]
    %v155 = vld [vmem:[%s3 + $0x10] sm:$0xff]
    %v156 = vld [vmem:[%s3 + $0x18] sm:$0xff]
    %158 = vset.pattern.permute.xlu0 0
    %159 = vperm.xlu0 %158, %v153
    %v160 = vpop.permute.xlu0 %159
    %163 = vset.pattern.permute.xlu0 0
    %164 = vperm.xlu0 %163, %v154
    %v165 = vpop.permute.xlu0 %164
    %168 = vset.pattern.permute.xlu0 0
    %169 = vperm.xlu0 %168, %v155
    %v170 = vpop.permute.xlu0 %169
    %173 = vset.pattern.permute.xlu0 0
    %174 = vperm.xlu0 %173, %v156
    %v175 = vpop.permute.xlu0 %174
    %v177 = vmul.f32 %v149, %v160
    %v178 = vmul.f32 %v150, %v165
    %v179 = vmul.f32 %v151, %v170
    %v180 = vmul.f32 %v152, %v175
    %v181 = vadd.f32 %v177, %v178
    %v182 = vadd.f32 %v181, %v179
    %v183 = vadd.f32 %v182, %v180
    %v184 = vrot.slane %v183, 4
    %v185 = vadd.f32 %v183, %v184
    %v186 = vrot.slane %v185, 2
    %v187 = vadd.f32 %v185, %v186
    %v188 = vrot.slane %v187, 1
    %v189 = vadd.f32 %v187, %v188
    %190 = vst [vmem:[#allocation2] sm:$0x1] %v189
    // Predicated region
    $region18: #{tpu_custom_call.1} parent=1 // pred_check
      _
    $region19: #{tpu_custom_call.1} parent=1 // pred_check_branch
      %192 = sbr.rel (0) target = $region21
    $region20: #{tpu_custom_call.1} parent=1 // pred_region
      %s194 = ssub.s32 16, 16
      %195 = vsyncadd [#allocation3], %s194
      %s197 = sshll.u32 [#allocation2], 4
      %s198 = int_to_ptr.vmem [resolvable:$true] %s197
      %200 = dma.vmem_to_hbm [thread:$0]  %s198, 16, %s4, [#allocation3]
    $region21: #{tpu_custom_call.1} parent=1 // pred_fallthru
      _
    // Predicated region
    $region22: #{tpu_custom_call.1} parent=1 // pred_check
      _
    $region23: #{tpu_custom_call.1} parent=1 // pred_check_branch
      %202 = sbr.rel (0) target = $region25
    $region24: #{tpu_custom_call.1} parent=1 // pred_region
      %203 = dma.done [#allocation3], 16
    $region25: #{tpu_custom_call.1} parent=1 // pred_fallthru
      _
    %204 = vsyncpa [#allocation3], 1

</llo_original>
